<compile_context>
chip_gen: v5e
topology: v5e:2x2
jax: 0.10.0
libtpu: 0.0.40
codegen_flags: <defaults>
</compile_context>

<pallas_src>
import jax
import jax.numpy as jnp
from jax.experimental import pallas as pl
from jax.experimental.pallas import tpu as pltpu


def discriminator_kernel(z_ref, w1_ref, b1_ref, w2_ref, b2_ref, w3_ref, b3_ref,
                         out_ref):
    """Fused 3-layer MLP: relu(x@W1+b1) @W2+b2 relu -> <.,w3>+b3 -> sigmoid."""
    x = z_ref[...]                                   # (TB, Z) bf16

    # Layer 1: Linear(Z, Z) + ReLU  (bf16 MXU operands, f32 accumulation)
    h1 = jnp.dot(x, w1_ref[...], preferred_element_type=jnp.float32)
    h1 = jnp.maximum(h1 + b1_ref[...], 0.0)          # f32 VPU

    # Layer 2: Linear(Z, Z) + ReLU
    h2 = jnp.dot(h1.astype(jnp.bfloat16), w2_ref[...],
                 preferred_element_type=jnp.float32)
    h2 = jnp.maximum(h2 + b2_ref[...], 0.0)          # f32 VPU

    # Layer 3: Linear(Z, 1) + Sigmoid.
    # N=1 matmul wastes a full MXU pass -> do a VPU multiply + lane reduction.
    h3 = jnp.sum(h2 * w3_ref[...], axis=-1, keepdims=True) + b3_ref[0, 0]
    out_ref[...] = jax.nn.sigmoid(h3).astype(out_ref.dtype)


def _round_up(x, m):
    return ((x + m - 1) // m) * m


def discriminator_forward(z, params, *, tb=512):
    """z: (B, Z) float32. params: dict of (in,out)-layout weights / biases.

    Runs the whole batch in one pallas_call with a batch grid. For best
    throughput, concatenate the real and fake latent batches and call once.
    """
    B, Z = z.shape

    # bf16 operands for the MXU (f32 accumulation happens inside the kernel).
    w1 = params["w1"].astype(jnp.bfloat16)           # (Z, Z)
    w2 = params["w2"].astype(jnp.bfloat16)           # (Z, Z)
    b1 = params["b1"].astype(jnp.float32)            # (1, Z)
    b2 = params["b2"].astype(jnp.float32)            # (1, Z)
    w3_row = params["w3"].reshape(1, Z).astype(jnp.float32)   # (1, Z) for VPU reduce
    b3 = params["b3"].reshape(1, 1).astype(jnp.float32)       # (1, 1) scalar -> SMEM

    # Batch tiling: biggest tile up to `tb`, multiple of 8 sublanes.
    tb = max(8, min(tb, _round_up(B, 8)))
    b_pad = _round_up(B, tb)
    zb = z.astype(jnp.bfloat16)
    if b_pad != B:
        zb = jnp.pad(zb, ((0, b_pad - B), (0, 0)))
    grid_b = b_pad // tb

    resident = lambda shape: pl.BlockSpec(shape, lambda i: (0, 0))

    out = pl.pallas_call(
        discriminator_kernel,
        out_shape=jax.ShapeDtypeStruct((b_pad, 1), jnp.float32),
        grid=(grid_b,),
        in_specs=[
            pl.BlockSpec((tb, Z), lambda i: (i, 0)),      # z tile, pipelined
            resident((Z, Z)), resident((1, Z)),           # W1, b1 (resident)
            resident((Z, Z)), resident((1, Z)),           # W2, b2 (resident)
            resident((1, Z)),                             # w3 row (resident)
            pl.BlockSpec(memory_space=pltpu.MemorySpace.SMEM),  # b3 scalar
        ],
        out_specs=pl.BlockSpec((tb, 1), lambda i: (i, 0)),
        compiler_params=pltpu.CompilerParams(
            dimension_semantics=("parallel",),            # shard batch across TCs
        ),
    )(zb, w1, b1, w2, b2, w3_row, b3)

    return out[:B]
    # TODO(synk): for full overhead amortization, fuse this MLP directly into
    # the surrounding WAE-GAN loss kernel instead of a standalone pallas_call.


def init_params(key, z_dim):
    """Params mirroring kaiming_init (kaiming_normal_ weights, normal_ biases).
    Weights are stored as (in, out) — the transpose of PyTorch's (out, in)."""
    ks = jax.random.split(key, 6)

    def kaiming(k, fan_in, fan_out):
        # kaiming_normal_ default: std = sqrt(2 / fan_in); built directly in
        # (in, out) layout with the same std.
        std = jnp.sqrt(2.0 / fan_in)
        return jax.random.normal(k, (fan_in, fan_out), jnp.float32) * std

    return {
        "w1": kaiming(ks[0], z_dim, z_dim),
        "b1": jax.random.normal(ks[1], (1, z_dim), jnp.float32),
        "w2": kaiming(ks[2], z_dim, z_dim),
        "b2": jax.random.normal(ks[3], (1, z_dim), jnp.float32),
        "w3": kaiming(ks[4], z_dim, 1),
        "b3": jax.random.normal(ks[5], (1, 1), jnp.float32),
    }


def reference_forward_f32(z, p):
    h1 = jnp.maximum(z @ p["w1"] + p["b1"], 0.0)
    h2 = jnp.maximum(h1 @ p["w2"] + p["b2"], 0.0)
    return jax.nn.sigmoid(h2 @ p["w3"] + p["b3"])


def reference_forward_bf16(z, p):
    """Matches the kernel's numerics: bf16 matmul operands, f32 accumulation."""
    bf = jnp.bfloat16
    h1 = jnp.dot(z.astype(bf), p["w1"].astype(bf),
                 preferred_element_type=jnp.float32)
    h1 = jnp.maximum(h1 + p["b1"], 0.0)
    h2 = jnp.dot(h1.astype(bf), p["w2"].astype(bf),
                 preferred_element_type=jnp.float32)
    h2 = jnp.maximum(h2 + p["b2"], 0.0)
    return jax.nn.sigmoid(h2 @ p["w3"] + p["b3"])


if __name__ == "__main__":
    Z_DIM = 32    # LATENT_DIM
    B_HALF = 8    # per-pass batch (real / fake)

    key = jax.random.PRNGKey(0)
    k_params, k_real, k_fake = jax.random.split(key, 3)
    params = init_params(k_params, Z_DIM)
    z_real = jax.random.normal(k_real, (B_HALF, Z_DIM), jnp.float32)
    z_fake = jax.random.normal(k_fake, (B_HALF, Z_DIM), jnp.float32)

    # Amortize launch/DMA overhead: one fused call for both discriminator passes.
    z = jnp.concatenate([z_real, z_fake], axis=0)     # (16, 32)

    out = jax.block_until_ready(discriminator_forward(z, params))
    assert out.shape == (2 * B_HALF, 1)

    ref_matched = reference_forward_bf16(z, params)   # same bf16-MXU numerics
    ref_f32 = reference_forward_f32(z, params)        # full-precision sanity check
    assert jnp.allclose(out, ref_matched, atol=1e-3, rtol=1e-3), \
        "mismatch vs bf16-matched JAX reference"
    assert jnp.allclose(out, ref_f32, atol=3e-2, rtol=0.0), \
        "mismatch vs f32 JAX reference"

    print("KERNEL_OK")
</pallas_src>

<mosaic_0001>
module attributes {stable_mosaic.version = 11 : i64} {
  func.func @discriminator_kernel(%arg0: i32, %arg1: memref<16x32xbf16, #tpu.memory_space<vmem>>, %arg2: memref<32x32xbf16, #tpu.memory_space<vmem>>, %arg3: memref<1x32xf32, #tpu.memory_space<vmem>>, %arg4: memref<32x32xbf16, #tpu.memory_space<vmem>>, %arg5: memref<1x32xf32, #tpu.memory_space<vmem>>, %arg6: memref<1x32xf32, #tpu.memory_space<vmem>>, %arg7: memref<1x1xf32, #tpu.memory_space<smem>>, %arg8: memref<16x1xf32, #tpu.memory_space<vmem>>) attributes {dimension_semantics = [#tpu.dimension_semantics<parallel>], iteration_bounds = array<i64: 1>, scalar_prefetch = 0 : i64, scratch_operands = 0 : i64, tpu.core_type = #tpu.core_type<tc>, window_params = [{transform_indices = @transform_0, window_bounds = array<i64: 16, 32>}, {pipeline_mode = #tpu.pipeline_mode<synchronous>, transform_indices = @transform_1, window_bounds = array<i64: 32, 32>}, {pipeline_mode = #tpu.pipeline_mode<synchronous>, transform_indices = @transform_2, window_bounds = array<i64: 1, 32>}, {pipeline_mode = #tpu.pipeline_mode<synchronous>, transform_indices = @transform_3, window_bounds = array<i64: 32, 32>}, {pipeline_mode = #tpu.pipeline_mode<synchronous>, transform_indices = @transform_4, window_bounds = array<i64: 1, 32>}, {pipeline_mode = #tpu.pipeline_mode<synchronous>, transform_indices = @transform_5, window_bounds = array<i64: 1, 32>}, {transform_indices = @transform_6, window_bounds = array<i64: 1, 1>}, {transform_indices = @transform_7, window_bounds = array<i64: 16, 1>}]} {
    %c0 = arith.constant 0 : index
    %c0_0 = arith.constant 0 : index
    %0 = vector.load %arg1[%c0, %c0_0] : memref<16x32xbf16, #tpu.memory_space<vmem>>, vector<16x32xbf16>
    %c0_1 = arith.constant 0 : index
    %c0_2 = arith.constant 0 : index
    %1 = vector.load %arg2[%c0_1, %c0_2] : memref<32x32xbf16, #tpu.memory_space<vmem>>, vector<32x32xbf16>
    %cst = arith.constant dense<0.000000e+00> : vector<16x32xf32>
    %2 = tpu.matmul %0, %1, %cst {dimension_numbers = #tpu.dot_dimension_numbers<[1], [0], [0], [1], [0, 0, 1, 1], [], []>} : vector<16x32xbf16>, vector<32x32xbf16>, vector<16x32xf32> -> vector<16x32xf32>
    %c0_3 = arith.constant 0 : index
    %c0_4 = arith.constant 0 : index
    %3 = vector.load %arg3[%c0_3, %c0_4] : memref<1x32xf32, #tpu.memory_space<vmem>>, vector<1x32xf32>
    %4 = vector.broadcast %3 : vector<1x32xf32> to vector<16x32xf32>
    %5 = arith.addf %2, %4 : vector<16x32xf32>
    %cst_5 = arith.constant 0.000000e+00 : f32
    %6 = vector.broadcast %cst_5 : f32 to vector<16x32xf32>
    %7 = arith.maximumf %5, %6 : vector<16x32xf32>
    %8 = arith.truncf %7 : vector<16x32xf32> to vector<16x32xbf16>
    %c0_6 = arith.constant 0 : index
    %c0_7 = arith.constant 0 : index
    %9 = vector.load %arg4[%c0_6, %c0_7] : memref<32x32xbf16, #tpu.memory_space<vmem>>, vector<32x32xbf16>
    %cst_8 = arith.constant dense<0.000000e+00> : vector<16x32xf32>
    %10 = tpu.matmul %8, %9, %cst_8 {dimension_numbers = #tpu.dot_dimension_numbers<[1], [0], [0], [1], [0, 0, 1, 1], [], []>} : vector<16x32xbf16>, vector<32x32xbf16>, vector<16x32xf32> -> vector<16x32xf32>
    %c0_9 = arith.constant 0 : index
    %c0_10 = arith.constant 0 : index
    %11 = vector.load %arg5[%c0_9, %c0_10] : memref<1x32xf32, #tpu.memory_space<vmem>>, vector<1x32xf32>
    %12 = vector.broadcast %11 : vector<1x32xf32> to vector<16x32xf32>
    %13 = arith.addf %10, %12 : vector<16x32xf32>
    %cst_11 = arith.constant 0.000000e+00 : f32
    %14 = vector.broadcast %cst_11 : f32 to vector<16x32xf32>
    %15 = arith.maximumf %13, %14 : vector<16x32xf32>
    %c0_12 = arith.constant 0 : index
    %c0_13 = arith.constant 0 : index
    %16 = vector.load %arg6[%c0_12, %c0_13] : memref<1x32xf32, #tpu.memory_space<vmem>>, vector<1x32xf32>
    %17 = vector.broadcast %16 : vector<1x32xf32> to vector<16x32xf32>
    %18 = arith.mulf %15, %17 : vector<16x32xf32>
    %cst_14 = arith.constant dense<0.000000e+00> : vector<16xf32>
    %19 = vector.multi_reduction <add>, %18, %cst_14 [1] : vector<16x32xf32> to vector<16xf32>
    %20 = vector.shape_cast %19 : vector<16xf32> to vector<16x1xf32>
    %c0_15 = arith.constant 0 : index
    %c0_16 = arith.constant 0 : index
    %21 = memref.load %arg7[%c0_15, %c0_16] : memref<1x1xf32, #tpu.memory_space<smem>>
    %22 = vector.broadcast %21 : f32 to vector<16x1xf32>
    %23 = arith.addf %20, %22 : vector<16x1xf32>
    %24 = arith.negf %23 : vector<16x1xf32>
    %25 = math.exp %24 : vector<16x1xf32>
    %cst_17 = arith.constant 1.000000e+00 : f32
    %26 = vector.broadcast %cst_17 : f32 to vector<16x1xf32>
    %27 = arith.addf %26, %25 : vector<16x1xf32>
    %28 = arith.divf %26, %27 : vector<16x1xf32>
    %c0_18 = arith.constant 0 : index
    %c0_19 = arith.constant 0 : index
    %29 = vector.load %arg8[%c0_18, %c0_19] : memref<16x1xf32, #tpu.memory_space<vmem>>, vector<16x1xf32>
    tpu.vector_store %arg8[%c0_18, %c0_19], %28 {strides = array<i32>} : memref<16x1xf32, #tpu.memory_space<vmem>>, vector<16x1xf32>,
    return
  }
  func.func @transform_0(%arg0: i32) -> (i32, i32) {
    %c0_i32 = arith.constant 0 : i32
    %c0_i32_0 = arith.constant 0 : i32
    return %arg0, %c0_i32 : i32, i32
  }
  func.func @transform_1(%arg0: i32) -> (i32, i32) {
    %c0_i32 = arith.constant 0 : i32
    %c0_i32_0 = arith.constant 0 : i32
    %c0_i32_1 = arith.constant 0 : i32
    return %c0_i32, %c0_i32_0 : i32, i32
  }
  func.func @transform_2(%arg0: i32) -> (i32, i32) {
    %c0_i32 = arith.constant 0 : i32
    %c0_i32_0 = arith.constant 0 : i32
    %c0_i32_1 = arith.constant 0 : i32
    return %c0_i32, %c0_i32_0 : i32, i32
  }
  func.func @transform_3(%arg0: i32) -> (i32, i32) {
    %c0_i32 = arith.constant 0 : i32
    %c0_i32_0 = arith.constant 0 : i32
    %c0_i32_1 = arith.constant 0 : i32
    return %c0_i32, %c0_i32_0 : i32, i32
  }
  func.func @transform_4(%arg0: i32) -> (i32, i32) {
    %c0_i32 = arith.constant 0 : i32
    %c0_i32_0 = arith.constant 0 : i32
    %c0_i32_1 = arith.constant 0 : i32
    return %c0_i32, %c0_i32_0 : i32, i32
  }
  func.func @transform_5(%arg0: i32) -> (i32, i32) {
    %c0_i32 = arith.constant 0 : i32
    %c0_i32_0 = arith.constant 0 : i32
    %c0_i32_1 = arith.constant 0 : i32
    return %c0_i32, %c0_i32_0 : i32, i32
  }
  func.func @transform_6(%arg0: i32) -> (i32, i32) {
    %c0_i32 = arith.constant 0 : i32
    %c0_i32_0 = arith.constant 0 : i32
    %c0_i32_1 = arith.constant 0 : i32
    return %c0_i32, %c0_i32_0 : i32, i32
  }
  func.func @transform_7(%arg0: i32) -> (i32, i32) {
    %c0_i32 = arith.constant 0 : i32
    %c0_i32_0 = arith.constant 0 : i32
    return %arg0, %c0_i32 : i32, i32
  }
}

</mosaic_0001>

<llo_original>
// kernel: tpu_custom_call.1
$region0: #{tpu_custom_call.1}
  #allocation0 [shape = 'u32[]', space=smem, size = 0x4, offset = 0x4, fixed_abs, tag = 'smem constant byte address 0x4 - core index']
  #allocation1 [shape = 'u32[72,128]{1,0:T(1,128)}', space=vmem, size = 0x9000, scoped, tag = 'internal scratch']
  #allocation2 [shape = 'f32[1,1]{1,0:T(1,128)S(6)}', space=smem, size = 0x200, scoped, tag = 'scoped memory for tpu_custom_call.1']
  %s0 = inlined_call_operand.hbm [shape: bf16[16,32], index: 0, kind: input, shape index: {}]
  %s1 = inlined_call_operand.hbm [shape: bf16[32,32], index: 1, kind: input, shape index: {}]
  %s2 = inlined_call_operand.vmem [shape: f32[1,32], index: 2, kind: input, shape index: {}]
  %s3 = inlined_call_operand.hbm [shape: bf16[32,32], index: 3, kind: input, shape index: {}]
  %s4 = inlined_call_operand.vmem [shape: f32[1,32], index: 4, kind: input, shape index: {}]
  %s5 = inlined_call_operand.vmem [shape: f32[1,32], index: 5, kind: input, shape index: {}]
  %s6 = inlined_call_operand.<no memory space> [shape: f32[1,1], index: 6, kind: input, shape index: {}]
  %s7 = inlined_call_operand.vmem [shape: f32[16,1], index: 7, kind: output, shape index: {}]
  %s8 = sld [smem:[#allocation0]]
  $region50: #{tpu_custom_call.1} parent=0
    _
  %s10 = ssub.s32 1, %s8
  %s11 = scalar_select 0, %s10, %s8
  %12 = sst [smem:[#allocation2]] %s6
  $region1: #{tpu_custom_call.1} parent=0
    #allocation3 [shape = 'u8[4096]{0}', space=vmem, size = 0x1000, scoped, tag = 'input window, operand 0, single buffered']
    #allocation4 [shape = 's32[1]{0}', space=sflag, size = 0x4, scoped, tag = 'scoped memory for tpu_custom_call.1']
    #allocation5 [shape = 'u8[8192]{0}', space=vmem, size = 0x2000, scoped, tag = 'input window, operand 1, single buffered']
    #allocation6 [shape = 's32[1]{0}', space=sflag, size = 0x4, scoped, tag = 'scoped memory for tpu_custom_call.1']
    #allocation7 [shape = 'u8[8192]{0}', space=vmem, size = 0x2000, scoped, tag = 'input window, operand 3, single buffered']
    %13 = vsyncpa [#allocation4], 0
    %14 = vsyncpa [#allocation6], 0
    // Predicated region
    $region2: #{tpu_custom_call.1} parent=1 // pred_check
      _
    $region3: #{tpu_custom_call.1} parent=1 // pred_check_branch
      %16 = sbr.rel (0) target = $region5
    $region4: #{tpu_custom_call.1} parent=1 // pred_region
      %18 = vsyncadd [#allocation4], 0
      %s19 = sshll.u32 %s0, 4
      %s20 = int_to_ptr.hbm [resolvable:$true] %s19
      %s21 = sshll.u32 [#allocation3], 4
      %s22 = int_to_ptr.vmem [resolvable:$true] %s21
      %27 = dma.hbm_to_vmem [thread:$0]  %s20, 128, %s22, [#allocation4], 64, 64, 4
    $region5: #{tpu_custom_call.1} parent=1 // pred_fallthru
      _
    // Predicated region
    $region6: #{tpu_custom_call.1} parent=1 // pred_check
      _
    $region7: #{tpu_custom_call.1} parent=1 // pred_check_branch
      %29 = sbr.rel (0) target = $region9
    $region8: #{tpu_custom_call.1} parent=1 // pred_region
      %31 = vsyncadd [#allocation6], 0
      %s32 = sshll.u32 %s1, 4
      %s33 = int_to_ptr.hbm [resolvable:$true] %s32
      %s34 = sshll.u32 [#allocation5], 4
      %s35 = int_to_ptr.vmem [resolvable:$true] %s34
      %40 = dma.hbm_to_vmem [thread:$0]  %s33, 256, %s35, [#allocation6], 64, 64, 4
    $region9: #{tpu_custom_call.1} parent=1 // pred_fallthru
      _
    // Predicated region
    $region10: #{tpu_custom_call.1} parent=1 // pred_check
      _
    $region11: #{tpu_custom_call.1} parent=1 // pred_check_branch
      %42 = sbr.rel (0) target = $region13
    $region12: #{tpu_custom_call.1} parent=1 // pred_region
      _
    $region13: #{tpu_custom_call.1} parent=1 // pred_fallthru
      _
    // Predicated region
    $region14: #{tpu_custom_call.1} parent=1 // pred_check
      _
    $region15: #{tpu_custom_call.1} parent=1 // pred_check_branch
      %44 = sbr.rel (0) target = $region17
    $region16: #{tpu_custom_call.1} parent=1 // pred_region
      %46 = vsyncadd [#allocation6], 0
      %s47 = sshll.u32 %s3, 4
      %s48 = int_to_ptr.hbm [resolvable:$true] %s47
      %s49 = sshll.u32 [#allocation7], 4
      %s50 = int_to_ptr.vmem [resolvable:$true] %s49
      %55 = dma.hbm_to_vmem [thread:$0]  %s48, 256, %s50, [#allocation6], 64, 64, 4
    $region17: #{tpu_custom_call.1} parent=1 // pred_fallthru
      _
    // Predicated region
    $region18: #{tpu_custom_call.1} parent=1 // pred_check
      _
    $region19: #{tpu_custom_call.1} parent=1 // pred_check_branch
      %57 = sbr.rel (0) target = $region21
    $region20: #{tpu_custom_call.1} parent=1 // pred_region
      _
    $region21: #{tpu_custom_call.1} parent=1 // pred_fallthru
      _
    // Predicated region
    $region22: #{tpu_custom_call.1} parent=1 // pred_check
      _
    $region23: #{tpu_custom_call.1} parent=1 // pred_check_branch
      %59 = sbr.rel (0) target = $region25
    $region24: #{tpu_custom_call.1} parent=1 // pred_region
      _
    $region25: #{tpu_custom_call.1} parent=1 // pred_fallthru
      _
    // Predicated region
    $region26: #{tpu_custom_call.1} parent=1 // pred_check
      _
    $region27: #{tpu_custom_call.1} parent=1 // pred_check_branch
      %61 = sbr.rel (0) target = $region29
    $region28: #{tpu_custom_call.1} parent=1 // pred_region
      _
    $region29: #{tpu_custom_call.1} parent=1 // pred_fallthru
      _
    // Predicated region
    $region30: #{tpu_custom_call.1} parent=1 // pred_check
      _
    $region31: #{tpu_custom_call.1} parent=1 // pred_check_branch
      %63 = sbr.rel (0) target = $region33
    $region32: #{tpu_custom_call.1} parent=1 // pred_region
      %65 = dma.done [#allocation4], 128
    $region33: #{tpu_custom_call.1} parent=1 // pred_fallthru
      _
    // Predicated region
    $region34: #{tpu_custom_call.1} parent=1 // pred_check
      _
    $region35: #{tpu_custom_call.1} parent=1 // pred_check_branch
      %67 = sbr.rel (0) target = $region37
    $region36: #{tpu_custom_call.1} parent=1 // pred_region
      %69 = dma.done [#allocation6], 256
    $region37: #{tpu_custom_call.1} parent=1 // pred_fallthru
      _
    // Predicated region
    $region38: #{tpu_custom_call.1} parent=1 // pred_check
      _
    $region39: #{tpu_custom_call.1} parent=1 // pred_check_branch
      %71 = sbr.rel (0) target = $region41
    $region40: #{tpu_custom_call.1} parent=1 // pred_region
      %73 = dma.done [#allocation6], 256
    $region41: #{tpu_custom_call.1} parent=1 // pred_fallthru
      _
    %v75 = vld [vmem:[#allocation3] sm:$0xf]
    %v76 = vld [vmem:[#allocation3 + $0x4] sm:$0xf]
    %v77 = vld [vmem:[#allocation5] sm:$0xf]
    %v78 = vld [vmem:[#allocation5 + $0x4] sm:$0xf]
    %v79 = vld [vmem:[#allocation5 + $0x8] sm:$0xf]
    %v80 = vld [vmem:[#allocation5 + $0xc] sm:$0xf]
    %v81 = vld [vmem:[%s2] sm:$0x1]
    %v83 = vperm.slane %v81, 0
    %v87 = vunpack.c.l.b16 %v75
    %v88 = vunpack.c.l.b16 %v76
    %v89 = vpack.c.b16 %v88, %v87
    %v94 = vunpack.c.l.b16 %v77
    %v95 = vunpack.c.l.b16 %v78
    %v96 = vunpack.c.l.b16 %v79
    %v97 = vunpack.c.l.b16 %v80
    %v98 = vpack.c.b16 %v95, %v94
    %v99 = vpack.c.b16 %v97, %v96
    %vm102 = vcmask 261120
    %v104 = vsel %vm102, %v89, 0
    %106 = vmatpush.bf16.msra.mxu0 0
    %107 = vmatpush.bf16.msra.mxu0 0
    %108 = vmatpush.bf16.msra.mxu0 0
    %109 = vmatpush.bf16.msra.mxu0 0
    %110 = vmatpush.bf16.msra.mxu0 0
    %111 = vmatpush.bf16.msra.mxu0 0
    %112 = vmatpush.bf16.msra.mxu0 %v99
    %113 = vmatpush.bf16.msra.mxu0 %v98
    %114 = vmatmul.bf16.gmra.mxu0 %v104
    %v115 = vpop.f32.mrf.mxu0
    %v116 = vadd.f32 %v83, %v115
    %v117 = vpop.f32.mrf.mxu0
    %v118 = vadd.f32 %v83, %v117
    %119 = vdwg.mxu0
    %v120 = vmax.f32 %v116, 0.0
    %v121 = vmax.f32 %v118, 0.0
    %v122 = vpack.c.bf16 %v121, %v120
    %v123 = vld [vmem:[#allocation7] sm:$0xf]
    %v124 = vld [vmem:[#allocation7 + $0x4] sm:$0xf]
    %v125 = vld [vmem:[#allocation7 + $0x8] sm:$0xf]
    %v126 = vld [vmem:[#allocation7 + $0xc] sm:$0xf]
    %v127 = vld [vmem:[%s4] sm:$0x1]
    %v129 = vperm.slane %v127, 0
    %v135 = vunpack.c.l.b16 %v123
    %v136 = vunpack.c.l.b16 %v124
    %v137 = vunpack.c.l.b16 %v125
    %v138 = vunpack.c.l.b16 %v126
    %v139 = vpack.c.b16 %v136, %v135
    %v140 = vpack.c.b16 %v138, %v137
    %v144 = vsel %vm102, %v122, 0
    %146 = vmatpush.bf16.msra.mxu0 0
    %147 = vmatpush.bf16.msra.mxu0 0
    %148 = vmatpush.bf16.msra.mxu0 0
    %149 = vmatpush.bf16.msra.mxu0 0
    %150 = vmatpush.bf16.msra.mxu0 0
    %151 = vmatpush.bf16.msra.mxu0 0
    %152 = vmatpush.bf16.msra.mxu0 %v140
    %153 = vmatpush.bf16.msra.mxu0 %v139
    %154 = vmatmul.bf16.gmra.mxu0 %v144
    %v155 = vpop.f32.mrf.mxu0
    %v156 = vadd.f32 %v129, %v155
    %v157 = vpop.f32.mrf.mxu0
    %v158 = vadd.f32 %v129, %v157
    %159 = vdwg.mxu0
    %v160 = vmax.f32 %v156, 0.0
    %v161 = vmax.f32 %v158, 0.0
    %v162 = vld [vmem:[%s5] sm:$0x1]
    %v164 = vperm.slane %v162, 0
    %v166 = vmul.f32 %v160, %v164
    %v167 = vmul.f32 %v161, %v164
    %v168 = vsel %vm102, %v166, 0.0
    %169 = vadd.xlane.f32.xlu0 %v168
    %v170 = vpop.xlane.xlu0 %169
    %v171 = vsel %vm102, %v167, 0.0
    %172 = vadd.xlane.f32.xlu0 %v171
    %v173 = vpop.xlane.xlu0 %172
    %s174 = sld [smem:[#allocation2]]
    %v175 = vstv %s174
    %v176 = vadd.f32 %v170, %v175
    %v177 = vadd.f32 %v173, %v175
    %v178 = vxor.u32 %v176, 2147483648
    %v179 = vxor.u32 %v177, 2147483648
    %v180 = vmul.f32 %v178, 1.442695
    %v181 = vpow.pop %v180
    %v182 = vmul.f32 %v179, 1.442695
    %v183 = vpow.pop %v182
    %v184 = vadd.f32 %v181, 1.0
    %v185 = vadd.f32 %v183, 1.0
    %v186 = vrcp.pop %v184
    %v187 = vmul.f32 %v184, %v186
    %v188 = vsub.f32 1.0, %v187
    %v189 = vmul.f32 %v186, %v188
    %v190 = vadd.f32 %v186, %v189
    %vm191 = vweird.f32 %v184
    %vm192 = vweird.f32 %v186
    %vm193 = vmor %vm191, %vm192
    %v194 = vsel %vm193, %v186, %v190
    %v195 = vand.u32 2147483647, %v184
    %vm196 = vcmp.eq.f32.partialorder %v195, 8.507059e+37
    %v197 = vand.u32 %v184, 2147483648
    %v198 = vor.u32 1.1754944e-38, %v197
    %v199 = vsel %vm196, %v198, %v194
    %v200 = vmul.f32 1.0, %v199
    %v201 = vrcp.pop %v185
    %v202 = vmul.f32 %v185, %v201
    %v203 = vsub.f32 1.0, %v202
    %v204 = vmul.f32 %v201, %v203
    %v205 = vadd.f32 %v201, %v204
    %vm206 = vweird.f32 %v185
    %vm207 = vweird.f32 %v201
    %vm208 = vmor %vm206, %vm207
    %v209 = vsel %vm208, %v201, %v205
    %v210 = vand.u32 2147483647, %v185
    %vm211 = vcmp.eq.f32.partialorder %v210, 8.507059e+37
    %v212 = vand.u32 %v185, 2147483648
    %v213 = vor.u32 1.1754944e-38, %v212
    %v214 = vsel %vm211, %v213, %v209
    %v215 = vmul.f32 1.0, %v214
    %vm216 = vcmask 7168
    %217 = vst.msk [vmem:[%s7] sm:$0xff] %vm216, %v200
    %218 = vst.msk [vmem:[%s7 + $0x8] sm:$0xff] %vm216, %v215
    // Predicated region
    $region42: #{tpu_custom_call.1} parent=1 // pred_check
      _
    $region43: #{tpu_custom_call.1} parent=1 // pred_check_branch
      %220 = sbr.rel (0) target = $region45
    $region44: #{tpu_custom_call.1} parent=1 // pred_region
      _
    $region45: #{tpu_custom_call.1} parent=1 // pred_fallthru
      _
    // Predicated region
    $region46: #{tpu_custom_call.1} parent=1 // pred_check
      _
    $region47: #{tpu_custom_call.1} parent=1 // pred_check_branch
      %222 = sbr.rel (0) target = $region49
    $region48: #{tpu_custom_call.1} parent=1 // pred_region
      _
    $region49: #{tpu_custom_call.1} parent=1 // pred_fallthru
      _
    %223 = vsyncpa [#allocation4], 1
    %224 = vsyncpa [#allocation6], 1

</llo_original>
